<compile_context>
chip_gen: v7x
topology: tpu7x:2x2x1
jax: 0.10.0
libtpu: 0.0.40
codegen_flags: <defaults>
</compile_context>

<pallas_src>
import numpy as np
import jax
import jax.numpy as jnp
from jax.experimental import pallas as pl
from jax.experimental.pallas import tpu as pltpu

TN_DEFAULT = 4096  # vertex tile width (lane aligned). Keeps the double-buffered working set
                   # well under every chip's scoped-VMEM default while amortizing per-step cost.


def _energy_kernel(coeff_ref, basis_ref, mu_ref, m_ref, out_ref):
    # coeff_ref: (1, Kp)      VMEM f32 -- [alpha*sigma_id ++ delta*sigma_exp], zero padded
    # basis_ref: (3, Kp, TN)  VMEM     -- PCA bases (identity ++ expression), f32 or bf16 stream
    # mu_ref:    (3, TN)      VMEM f32 -- mean shape (id + exp) for this vertex tile
    # m_ref:     (3, 4)       SMEM f32 -- rigid transform [R | t]
    # out_ref:   (3, TN)      VMEM f32 -- transformed points (x; y; z rows)
    coeff = coeff_ref[...]  # (1, Kp) f32

    # PCA blend (the hot matmul). A bf16 basis is upcast in-register; accumulation stays f32.
    # Kernel is HBM-bound, so the upcast / MXU precision path is hidden under the basis DMA.
    bx = basis_ref[0].astype(jnp.float32)
    by = basis_ref[1].astype(jnp.float32)
    bz = basis_ref[2].astype(jnp.float32)
    gx = jnp.dot(coeff, bx, preferred_element_type=jnp.float32) + mu_ref[0:1, :]
    gy = jnp.dot(coeff, by, preferred_element_type=jnp.float32) + mu_ref[1:2, :]
    gz = jnp.dot(coeff, bz, preferred_element_type=jnp.float32) + mu_ref[2:3, :]

    # Rigid transform: out = R @ G + t (12 scalar reads from SMEM; negligible vs. the basis DMA).
    out_ref[0:1, :] = m_ref[0, 0] * gx + m_ref[0, 1] * gy + m_ref[0, 2] * gz + m_ref[0, 3]
    out_ref[1:2, :] = m_ref[1, 0] * gx + m_ref[1, 1] * gy + m_ref[1, 2] * gz + m_ref[1, 3]
    out_ref[2:3, :] = m_ref[2, 0] * gx + m_ref[2, 1] * gy + m_ref[2, 2] * gz + m_ref[2, 3]


def _rotation_matrix_deg(w):
    """R = Rz(wz) @ Ry(wy) @ Rx(wx), angles in degrees, w = [wx, wy, wz]."""
    rx, ry, rz = jnp.deg2rad(w[0]), jnp.deg2rad(w[1]), jnp.deg2rad(w[2])
    cx, sx = jnp.cos(rx), jnp.sin(rx)
    cy, sy = jnp.cos(ry), jnp.sin(ry)
    cz, sz = jnp.cos(rz), jnp.sin(rz)
    one = jnp.float32(1.0)
    zero = jnp.float32(0.0)
    Rx = jnp.stack([jnp.stack([one, zero, zero]),
                    jnp.stack([zero, cx, -sx]),
                    jnp.stack([zero, sx, cx])])
    Ry = jnp.stack([jnp.stack([cy, zero, sy]),
                    jnp.stack([zero, one, zero]),
                    jnp.stack([-sy, zero, cy])])
    Rz = jnp.stack([jnp.stack([cz, -sz, zero]),
                    jnp.stack([sz, cz, zero]),
                    jnp.stack([zero, zero, one])])
    return Rz @ Ry @ Rx


def prepare_bfm(bfm, landmarks=None, *, basis_dtype=jnp.bfloat16, tn=None):
    """One-time (cacheable) preparation of the static BFM buffers for the Pallas kernel.

    Call this ONCE and reuse the result across forward() calls / optimizer steps: it is the only
    place the full basis is concatenated / padded / transposed / cast, so the per-step forward
    never re-streams the basis through HBM outside the kernel itself.

    If `landmarks` is given, only the static landmark columns of the basis / mean shape are kept
    (forward() only ever reads project_G[landmarks, :2]) -> ~N/L less HBM traffic per call.
    Leave landmarks=None if the full reconstructed mesh is needed elsewhere.
    """
    mu = (bfm["mu_id"] + bfm["mu_exp"]).astype(jnp.float32)                       # (3, N)
    basis = jnp.concatenate([bfm["E_id"], bfm["E_exp"]], axis=0)                  # (K, 3, N)
    sigma = jnp.concatenate([bfm["sigma_id"], bfm["sigma_exp"]]).astype(jnp.float32)  # (K,)
    K = basis.shape[0]

    if landmarks is not None:
        idx = jnp.asarray(landmarks, jnp.int32)
        basis = basis[:, :, idx]
        mu = mu[:, idx]
    N = mu.shape[1]

    if tn is None:
        tn = TN_DEFAULT
    # Never tile wider than the (lane-padded) data; keep tn a multiple of 128.
    tn = max(128, min(int(tn), pl.cdiv(N, 128) * 128))
    Np = pl.cdiv(N, tn) * tn

    # Contraction padding: (8, 128) layout only needs Kp % 8 == 0 for f32; bf16 packs 16/sublane.
    k_align = 16 if jnp.dtype(basis_dtype).itemsize < 4 else 8
    Kp = ((K + k_align - 1) // k_align) * k_align

    basis_t = jnp.transpose(basis, (1, 0, 2)).astype(basis_dtype)                 # (3, K, N)
    basis_p = jnp.zeros((3, Kp, Np), basis_dtype).at[:, :K, :N].set(basis_t)
    mu_p = jnp.zeros((3, Np), jnp.float32).at[:, :N].set(mu)

    return {
        "basis": basis_p, "mu": mu_p, "sigma": sigma,
        "K": K, "Kp": Kp, "N": N, "Np": Np, "tn": tn,
        "landmark_gathered": landmarks is not None,
    }


def energy_model_forward(alpha, delta, w, t, prepared, landmarks=None):
    """Pallas implementation of energy_model.forward(). Returns (L, 2) float32."""
    K, Kp = prepared["K"], prepared["Kp"]
    N, Np, tn = prepared["N"], prepared["Np"], prepared["tn"]

    # TODO(synk): if the outer optimizer evaluates several (alpha, delta) candidates at once,
    # stack them into coeff_p of shape (B, Kp) and emit (3, B, tn) blocks -- the basis stream
    # (the only real cost) is identical for any B up to ~128.
    coeff = jnp.concatenate([jnp.asarray(alpha), jnp.asarray(delta)]).astype(jnp.float32)
    coeff = coeff * prepared["sigma"]
    coeff_p = jnp.zeros((1, Kp), jnp.float32).at[0, :K].set(coeff)

    R = _rotation_matrix_deg(jnp.asarray(w, jnp.float32))
    M = jnp.concatenate([R, jnp.asarray(t, jnp.float32)[:, None]], axis=1)        # (3, 4) = [R | t]

    # Scoped-VMEM estimate: double-buffered basis/mu/out blocks + in-kernel f32 upcast temps.
    itemsize = jnp.dtype(prepared["basis"].dtype).itemsize
    vmem_est = (2 * 3 * Kp * tn * itemsize        # basis blocks (double buffered)
                + 2 * 2 * 3 * tn * 4              # mu + out blocks (double buffered)
                + 3 * Kp * tn * 4                 # bf16 -> f32 upcast temporaries
                + (256 << 10))                    # coeff, [R|t], slack
    vmem_limit = int(min(vmem_est + (4 << 20), 48 << 20)) if vmem_est > (12 << 20) else None

    out = pl.pallas_call(
        _energy_kernel,
        out_shape=jax.ShapeDtypeStruct((3, Np), jnp.float32),
        grid=(Np // tn,),
        in_specs=[
            pl.BlockSpec((1, Kp), lambda i: (0, 0)),
            pl.BlockSpec((3, Kp, tn), lambda i: (0, 0, i)),
            pl.BlockSpec((3, tn), lambda i: (0, i)),
            pl.BlockSpec(memory_space=pltpu.MemorySpace.SMEM),
        ],
        out_specs=pl.BlockSpec((3, tn), lambda i: (0, i)),
        compiler_params=pltpu.CompilerParams(
            dimension_semantics=("parallel",),
            vmem_limit_bytes=vmem_limit,
        ),
    )(coeff_p, prepared["basis"], prepared["mu"], M)

    # Gather/slice on the lane-major (3, Np) layout -- no full (N, 3) transpose materialized.
    if prepared["landmark_gathered"]:
        pts = out[:2, :N]                         # columns are already the landmarks, in order
    else:
        pts = out[:2, jnp.asarray(landmarks)]
    return pts.T                                  # (L, 2): tiny transpose


def reference_forward(alpha, delta, w, t, bfm, landmarks, basis_dtype=jnp.float32):
    """Pure-JAX reference of the same semantics (optionally with a quantized basis)."""
    mu = (bfm["mu_id"] + bfm["mu_exp"]).astype(jnp.float32)                        # (3, N)
    coeff = jnp.concatenate([alpha * bfm["sigma_id"], delta * bfm["sigma_exp"]])
    basis = jnp.concatenate([bfm["E_id"], bfm["E_exp"]], axis=0)                   # (K, 3, N)
    basis = basis.astype(basis_dtype).astype(jnp.float32)
    G = mu + jnp.einsum("k,kcn->cn", coeff, basis)                                 # (3, N)
    R = _rotation_matrix_deg(jnp.asarray(w, jnp.float32))
    P = (R @ G + jnp.asarray(t, jnp.float32)[:, None]).T                           # (N, 3)
    return P[landmarks, :2]


if __name__ == "__main__":
    key = jax.random.PRNGKey(0)
    N = 300                 # deliberately NOT a multiple of 128: exercises the padding path
    n_alpha, n_delta = 30, 20
    ks = jax.random.split(key, 6)

    # Synthetic (deterministic) Basel Face Model buffers.
    bfm = {
        "mu_id":   jax.random.normal(ks[0], (3, N), jnp.float32),
        "mu_exp":  0.1 * jax.random.normal(ks[1], (3, N), jnp.float32),
        "E_id":    jax.random.normal(ks[2], (n_alpha, 3, N), jnp.float32),
        "E_exp":   jax.random.normal(ks[3], (n_delta, 3, N), jnp.float32),
        "sigma_id":  jnp.abs(jax.random.normal(ks[4], (n_alpha,), jnp.float32)),
        "sigma_exp": jnp.abs(jax.random.normal(ks[5], (n_delta,), jnp.float32)),
    }
    landmarks = jnp.array([3, 17, 42, 77, 100, 150, 200, 255, 280, 299], dtype=jnp.int32)

    # Parameters exactly as the module's __init__ builds them:
    # alpha = zeros(30), delta = zeros(20), w = [0, 10, 0], t = [0, 0, -500].
    alpha0 = jnp.zeros((n_alpha,), jnp.float32)
    delta0 = jnp.zeros((n_delta,), jnp.float32)
    w = jnp.array([0.0, 10.0, 0.0], jnp.float32)
    t = jnp.array([0.0, 0.0, -500.0], jnp.float32)
    # Non-zero latents (as after some optimizer steps) to exercise the PCA matmul path.
    alpha1 = 0.01 * jnp.arange(n_alpha, dtype=jnp.float32)
    delta1 = -0.02 * jnp.arange(n_delta, dtype=jnp.float32)

    # --- 1) Full-mesh kernel, f32 basis: exact check against the pure-JAX reference. ---
    prep_f32 = prepare_bfm(bfm, basis_dtype=jnp.float32)
    for a, d in ((alpha0, delta0), (alpha1, delta1)):
        out = jax.block_until_ready(energy_model_forward(a, d, w, t, prep_f32, landmarks))
        ref = reference_forward(a, d, w, t, bfm, landmarks)
        assert out.shape == (landmarks.shape[0], 2)
        np.testing.assert_allclose(np.asarray(out), np.asarray(ref), rtol=1e-4, atol=1e-4)

    # --- 2) Full-mesh kernel, bf16 basis stream (default): check against the reference that
    #        uses the same bf16-quantized basis (coeff / mu / accumulation stay f32). ---
    prep_bf16 = prepare_bfm(bfm)
    out = jax.block_until_ready(energy_model_forward(alpha1, delta1, w, t, prep_bf16, landmarks))
    ref_q = reference_forward(alpha1, delta1, w, t, bfm, landmarks, basis_dtype=jnp.bfloat16)
    np.testing.assert_allclose(np.asarray(out), np.asarray(ref_q), rtol=1e-2, atol=1e-2)

    # --- 3) Landmark-only fast path (forward() only needs the landmark rows). ---
    prep_lm = prepare_bfm(bfm, landmarks=landmarks, basis_dtype=jnp.float32)
    out = jax.block_until_ready(energy_model_forward(alpha1, delta1, w, t, prep_lm))
    ref = reference_forward(alpha1, delta1, w, t, bfm, landmarks)
    np.testing.assert_allclose(np.asarray(out), np.asarray(ref), rtol=1e-4, atol=1e-4)

    print("KERNEL_OK")
</pallas_src>

<mosaic_0001>
module attributes {stable_mosaic.version = 11 : i64} {
  func.func @_energy_kernel(%arg0: i32, %arg1: memref<1x56xf32, #tpu.memory_space<vmem>>, %arg2: memref<3x56x384xf32, #tpu.memory_space<vmem>>, %arg3: memref<3x384xf32, #tpu.memory_space<vmem>>, %arg4: memref<3x4xf32, #tpu.memory_space<smem>>, %arg5: memref<3x384xf32, #tpu.memory_space<vmem>>) attributes {dimension_semantics = [#tpu.dimension_semantics<parallel>], iteration_bounds = array<i64: 1>, scalar_prefetch = 0 : i64, scratch_operands = 0 : i64, tpu.core_type = #tpu.core_type<tc>, window_params = [{pipeline_mode = #tpu.pipeline_mode<synchronous>, transform_indices = @transform_0, window_bounds = array<i64: 1, 56>}, {transform_indices = @transform_1, window_bounds = array<i64: 3, 56, 384>}, {transform_indices = @transform_2, window_bounds = array<i64: 3, 384>}, {transform_indices = @transform_3, window_bounds = array<i64: 3, 4>}, {transform_indices = @transform_4, window_bounds = array<i64: 3, 384>}]} {
    %c0 = arith.constant 0 : index
    %c0_0 = arith.constant 0 : index
    %0 = vector.load %arg1[%c0, %c0_0] : memref<1x56xf32, #tpu.memory_space<vmem>>, vector<1x56xf32>
    %c0_1 = arith.constant 0 : index
    %c0_2 = arith.constant 0 : index
    %c0_3 = arith.constant 0 : index
    %1 = vector.load %arg2[%c0_1, %c0_2, %c0_3] : memref<3x56x384xf32, #tpu.memory_space<vmem>>, vector<1x56x384xf32>
    %2 = vector.shape_cast %1 : vector<1x56x384xf32> to vector<56x384xf32>
    %c1 = arith.constant 1 : index
    %c0_4 = arith.constant 0 : index
    %c0_5 = arith.constant 0 : index
    %3 = vector.load %arg2[%c1, %c0_4, %c0_5] : memref<3x56x384xf32, #tpu.memory_space<vmem>>, vector<1x56x384xf32>
    %4 = vector.shape_cast %3 : vector<1x56x384xf32> to vector<56x384xf32>
    %c2 = arith.constant 2 : index
    %c0_6 = arith.constant 0 : index
    %c0_7 = arith.constant 0 : index
    %5 = vector.load %arg2[%c2, %c0_6, %c0_7] : memref<3x56x384xf32, #tpu.memory_space<vmem>>, vector<1x56x384xf32>
    %6 = vector.shape_cast %5 : vector<1x56x384xf32> to vector<56x384xf32>
    %cst = arith.constant dense<0.000000e+00> : vector<1x384xf32>
    %7 = tpu.matmul %0, %2, %cst {dimension_numbers = #tpu.dot_dimension_numbers<[1], [0], [0], [1], [0, 0, 1, 1], [], []>} : vector<1x56xf32>, vector<56x384xf32>, vector<1x384xf32> -> vector<1x384xf32>
    %c0_8 = arith.constant 0 : index
    %c0_9 = arith.constant 0 : index
    %8 = vector.load %arg3[%c0_8, %c0_9] : memref<3x384xf32, #tpu.memory_space<vmem>>, vector<1x384xf32>
    %9 = arith.addf %7, %8 : vector<1x384xf32>
    %cst_10 = arith.constant dense<0.000000e+00> : vector<1x384xf32>
    %10 = tpu.matmul %0, %4, %cst_10 {dimension_numbers = #tpu.dot_dimension_numbers<[1], [0], [0], [1], [0, 0, 1, 1], [], []>} : vector<1x56xf32>, vector<56x384xf32>, vector<1x384xf32> -> vector<1x384xf32>
    %c1_11 = arith.constant 1 : index
    %c0_12 = arith.constant 0 : index
    %11 = vector.load %arg3[%c1_11, %c0_12] : memref<3x384xf32, #tpu.memory_space<vmem>>, vector<1x384xf32>
    %12 = arith.addf %10, %11 : vector<1x384xf32>
    %cst_13 = arith.constant dense<0.000000e+00> : vector<1x384xf32>
    %13 = tpu.matmul %0, %6, %cst_13 {dimension_numbers = #tpu.dot_dimension_numbers<[1], [0], [0], [1], [0, 0, 1, 1], [], []>} : vector<1x56xf32>, vector<56x384xf32>, vector<1x384xf32> -> vector<1x384xf32>
    %c2_14 = arith.constant 2 : index
    %c0_15 = arith.constant 0 : index
    %14 = vector.load %arg3[%c2_14, %c0_15] : memref<3x384xf32, #tpu.memory_space<vmem>>, vector<1x384xf32>
    %15 = arith.addf %13, %14 : vector<1x384xf32>
    %c0_16 = arith.constant 0 : index
    %c0_17 = arith.constant 0 : index
    %16 = memref.load %arg4[%c0_16, %c0_17] : memref<3x4xf32, #tpu.memory_space<smem>>
    %17 = vector.broadcast %16 : f32 to vector<1x384xf32>
    %18 = arith.mulf %17, %9 : vector<1x384xf32>
    %c0_18 = arith.constant 0 : index
    %c1_19 = arith.constant 1 : index
    %19 = memref.load %arg4[%c0_18, %c1_19] : memref<3x4xf32, #tpu.memory_space<smem>>
    %20 = vector.broadcast %19 : f32 to vector<1x384xf32>
    %21 = arith.mulf %20, %12 : vector<1x384xf32>
    %22 = arith.addf %18, %21 : vector<1x384xf32>
    %c0_20 = arith.constant 0 : index
    %c2_21 = arith.constant 2 : index
    %23 = memref.load %arg4[%c0_20, %c2_21] : memref<3x4xf32, #tpu.memory_space<smem>>
    %24 = vector.broadcast %23 : f32 to vector<1x384xf32>
    %25 = arith.mulf %24, %15 : vector<1x384xf32>
    %26 = arith.addf %22, %25 : vector<1x384xf32>
    %c0_22 = arith.constant 0 : index
    %c3 = arith.constant 3 : index
    %27 = memref.load %arg4[%c0_22, %c3] : memref<3x4xf32, #tpu.memory_space<smem>>
    %28 = vector.broadcast %27 : f32 to vector<1x384xf32>
    %29 = arith.addf %26, %28 : vector<1x384xf32>
    %c0_23 = arith.constant 0 : index
    %c0_24 = arith.constant 0 : index
    %30 = vector.load %arg5[%c0_23, %c0_24] : memref<3x384xf32, #tpu.memory_space<vmem>>, vector<1x384xf32>
    tpu.vector_store %arg5[%c0_23, %c0_24], %29 {strides = array<i32>} : memref<3x384xf32, #tpu.memory_space<vmem>>, vector<1x384xf32>,
    %c1_25 = arith.constant 1 : index
    %c0_26 = arith.constant 0 : index
    %31 = memref.load %arg4[%c1_25, %c0_26] : memref<3x4xf32, #tpu.memory_space<smem>>
    %32 = vector.broadcast %31 : f32 to vector<1x384xf32>
    %33 = arith.mulf %32, %9 : vector<1x384xf32>
    %c1_27 = arith.constant 1 : index
    %c1_28 = arith.constant 1 : index
    %34 = memref.load %arg4[%c1_27, %c1_28] : memref<3x4xf32, #tpu.memory_space<smem>>
    %35 = vector.broadcast %34 : f32 to vector<1x384xf32>
    %36 = arith.mulf %35, %12 : vector<1x384xf32>
    %37 = arith.addf %33, %36 : vector<1x384xf32>
    %c1_29 = arith.constant 1 : index
    %c2_30 = arith.constant 2 : index
    %38 = memref.load %arg4[%c1_29, %c2_30] : memref<3x4xf32, #tpu.memory_space<smem>>
    %39 = vector.broadcast %38 : f32 to vector<1x384xf32>
    %40 = arith.mulf %39, %15 : vector<1x384xf32>
    %41 = arith.addf %37, %40 : vector<1x384xf32>
    %c1_31 = arith.constant 1 : index
    %c3_32 = arith.constant 3 : index
    %42 = memref.load %arg4[%c1_31, %c3_32] : memref<3x4xf32, #tpu.memory_space<smem>>
    %43 = vector.broadcast %42 : f32 to vector<1x384xf32>
    %44 = arith.addf %41, %43 : vector<1x384xf32>
    %c1_33 = arith.constant 1 : index
    %c0_34 = arith.constant 0 : index
    %45 = vector.load %arg5[%c1_33, %c0_34] : memref<3x384xf32, #tpu.memory_space<vmem>>, vector<1x384xf32>
    tpu.vector_store %arg5[%c1_33, %c0_34], %44 {strides = array<i32>} : memref<3x384xf32, #tpu.memory_space<vmem>>, vector<1x384xf32>,
    %c2_35 = arith.constant 2 : index
    %c0_36 = arith.constant 0 : index
    %46 = memref.load %arg4[%c2_35, %c0_36] : memref<3x4xf32, #tpu.memory_space<smem>>
    %47 = vector.broadcast %46 : f32 to vector<1x384xf32>
    %48 = arith.mulf %47, %9 : vector<1x384xf32>
    %c2_37 = arith.constant 2 : index
    %c1_38 = arith.constant 1 : index
    %49 = memref.load %arg4[%c2_37, %c1_38] : memref<3x4xf32, #tpu.memory_space<smem>>
    %50 = vector.broadcast %49 : f32 to vector<1x384xf32>
    %51 = arith.mulf %50, %12 : vector<1x384xf32>
    %52 = arith.addf %48, %51 : vector<1x384xf32>
    %c2_39 = arith.constant 2 : index
    %c2_40 = arith.constant 2 : index
    %53 = memref.load %arg4[%c2_39, %c2_40] : memref<3x4xf32, #tpu.memory_space<smem>>
    %54 = vector.broadcast %53 : f32 to vector<1x384xf32>
    %55 = arith.mulf %54, %15 : vector<1x384xf32>
    %56 = arith.addf %52, %55 : vector<1x384xf32>
    %c2_41 = arith.constant 2 : index
    %c3_42 = arith.constant 3 : index
    %57 = memref.load %arg4[%c2_41, %c3_42] : memref<3x4xf32, #tpu.memory_space<smem>>
    %58 = vector.broadcast %57 : f32 to vector<1x384xf32>
    %59 = arith.addf %56, %58 : vector<1x384xf32>
    %c2_43 = arith.constant 2 : index
    %c0_44 = arith.constant 0 : index
    %60 = vector.load %arg5[%c2_43, %c0_44] : memref<3x384xf32, #tpu.memory_space<vmem>>, vector<1x384xf32>
    tpu.vector_store %arg5[%c2_43, %c0_44], %59 {strides = array<i32>} : memref<3x384xf32, #tpu.memory_space<vmem>>, vector<1x384xf32>,
    return
  }
  func.func @transform_0(%arg0: i32) -> (i32, i32) {
    %c0_i32 = arith.constant 0 : i32
    %c0_i32_0 = arith.constant 0 : i32
    %c0_i32_1 = arith.constant 0 : i32
    return %c0_i32, %c0_i32_0 : i32, i32
  }
  func.func @transform_1(%arg0: i32) -> (i32, i32, i32) {
    %c0_i32 = arith.constant 0 : i32
    %c0_i32_0 = arith.constant 0 : i32
    %c0_i32_1 = arith.constant 0 : i32
    return %c0_i32, %c0_i32_0, %arg0 : i32, i32, i32
  }
  func.func @transform_2(%arg0: i32) -> (i32, i32) {
    %c0_i32 = arith.constant 0 : i32
    %c0_i32_0 = arith.constant 0 : i32
    return %c0_i32, %arg0 : i32, i32
  }
  func.func @transform_3(%arg0: i32) -> (i32, i32) {
    %c0_i32 = arith.constant 0 : i32
    %c0_i32_0 = arith.constant 0 : i32
    %c0_i32_1 = arith.constant 0 : i32
    return %c0_i32, %c0_i32_0 : i32, i32
  }
  func.func @transform_4(%arg0: i32) -> (i32, i32) {
    %c0_i32 = arith.constant 0 : i32
    %c0_i32_0 = arith.constant 0 : i32
    return %c0_i32, %arg0 : i32, i32
  }
}

</mosaic_0001>

<llo_original>
// kernel: tpu_custom_call.1
$region0: #{tpu_custom_call.1}
  #allocation0 [shape = 'u32[]', space=smem, size = 0x4, offset = 0x4, fixed_abs, tag = 'smem constant byte address 0x4 - core index']
  #allocation1 [shape = 'u32[144,128]{1,0:T(1,128)}', space=vmem, size = 0x12000, scoped, tag = 'internal scratch']
  %s0 = inlined_call_operand.hbm [shape: f32[1,56], index: 0, kind: input, shape index: {}]
  %s1 = inlined_call_operand.hbm [shape: f32[3,56,384], index: 1, kind: input, shape index: {}]
  %s2 = inlined_call_operand.hbm [shape: f32[3,384], index: 2, kind: input, shape index: {}]
  %s3 = inlined_call_operand.vmem [shape: f32[3,4], index: 3, kind: input, shape index: {}]
  %s4 = inlined_call_operand.hbm [shape: f32[3,384], index: 4, kind: output, shape index: {}]
  %s5 = sld [smem:[#allocation0]]
  $region42: #{tpu_custom_call.1} parent=0
    _
  %s7 = ssub.s32 1, %s5
  %s8 = scalar_select 0, %s7, %s5
  $region1: #{tpu_custom_call.1} parent=0
    #allocation2 [shape = 'u8[512]{0}', space=vmem, size = 0x400, scoped, tag = 'input window, operand 0, single buffered']
    #allocation3 [shape = 's32[1]{0}', space=sflag, size = 0x4, scoped, tag = 'scoped memory for tpu_custom_call.1']
    #allocation4 [shape = 's32[1]{0}', space=sflag, size = 0x4, scoped, tag = 'scoped memory for tpu_custom_call.1']
    #allocation5 [shape = 's32[1]{0}', space=sflag, size = 0x4, scoped, tag = 'scoped memory for tpu_custom_call.1']
    #allocation6 [shape = 'u8[258048]{0}', space=vmem, size = 0x3f000, scoped, tag = 'input window, operand 1, single buffered']
    #allocation7 [shape = 's32[1]{0}', space=sflag, size = 0x4, scoped, tag = 'scoped memory for tpu_custom_call.1']
    #allocation8 [shape = 'u8[6144]{0}', space=vmem, size = 0x1800, scoped, tag = 'input window, operand 2, single buffered']
    #allocation9 [shape = 'u8[2048]{0}', space=smem, size = 0x800, scoped, tag = 'input window, operand 3, single buffered']
    #allocation10 [shape = 'u8[6144]{0}', space=vmem, size = 0x1800, scoped, tag = 'output window, operand 0, single buffered']
    %9 = vsyncpa [#allocation3], 0
    %10 = vsyncpa [#allocation7], 0
    %11 = vsyncpa [#allocation5], 0
    %12 = vsyncpa [#allocation4], 0
    // Predicated region
    $region2: #{tpu_custom_call.1} parent=1 // pred_check
      _
    $region3: #{tpu_custom_call.1} parent=1 // pred_check_branch
      %14 = sbr.rel (0) target = $region5
    $region4: #{tpu_custom_call.1} parent=1 // pred_region
      %s16 = ssub.s32 16, 16
      %17 = vsyncadd [#allocation3], %s16
      %s19 = sshll.u32 [#allocation2], 4
      %s20 = int_to_ptr.vmem [resolvable:$true] %s19
      %22 = dma.hbm_to_vmem [thread:$0]  %s0, 16, %s20, [#allocation3]
    $region5: #{tpu_custom_call.1} parent=1 // pred_fallthru
      _
    // Predicated region
    $region6: #{tpu_custom_call.1} parent=1 // pred_check
      _
    $region7: #{tpu_custom_call.1} parent=1 // pred_check_branch
      %24 = sbr.rel (0) target = $region9
    $region8: #{tpu_custom_call.1} parent=1 // pred_region
      %s26 = ssub.s32 8064, 8064
      %27 = vsyncadd [#allocation7], %s26
      %s28 = sshll.u32 [#allocation6], 4
      %s29 = int_to_ptr.vmem [resolvable:$true] %s28
      %34 = dma.hbm_to_vmem [thread:$0]  %s1, 8064, %s29, [#allocation7], 384, 384, 24
    $region9: #{tpu_custom_call.1} parent=1 // pred_fallthru
      _
    // Predicated region
    $region10: #{tpu_custom_call.1} parent=1 // pred_check
      _
    $region11: #{tpu_custom_call.1} parent=1 // pred_check_branch
      %36 = sbr.rel (0) target = $region13
    $region12: #{tpu_custom_call.1} parent=1 // pred_region
      %s38 = ssub.s32 192, 192
      %39 = vsyncadd [#allocation7], %s38
      %s41 = sshll.u32 [#allocation8], 4
      %s42 = int_to_ptr.vmem [resolvable:$true] %s41
      %44 = dma.hbm_to_vmem [thread:$0]  %s2, 192, %s42, [#allocation7]
    $region13: #{tpu_custom_call.1} parent=1 // pred_fallthru
      _
    // Predicated region
    $region14: #{tpu_custom_call.1} parent=1 // pred_check
      _
    $region15: #{tpu_custom_call.1} parent=1 // pred_check_branch
      %46 = sbr.rel (0) target = $region17
    $region16: #{tpu_custom_call.1} parent=1 // pred_region
      %s48 = ssub.s32 64, 64
      %49 = vsyncadd [#allocation5], %s48
      %s51 = sshll.u32 %s3, 4
      %s52 = int_to_ptr.vmem [resolvable:$true] %s51
      %54 = dma.vmem_to_smem %s52, 64, [#allocation9], [#allocation5]
    $region17: #{tpu_custom_call.1} parent=1 // pred_fallthru
      _
    // Predicated region
    $region18: #{tpu_custom_call.1} parent=1 // pred_check
      _
    $region19: #{tpu_custom_call.1} parent=1 // pred_check_branch
      %56 = sbr.rel (0) target = $region21
    $region20: #{tpu_custom_call.1} parent=1 // pred_region
      %57 = dma.done [#allocation3], 16
    $region21: #{tpu_custom_call.1} parent=1 // pred_fallthru
      _
    // Predicated region
    $region22: #{tpu_custom_call.1} parent=1 // pred_check
      _
    $region23: #{tpu_custom_call.1} parent=1 // pred_check_branch
      %59 = sbr.rel (0) target = $region25
    $region24: #{tpu_custom_call.1} parent=1 // pred_region
      %60 = dma.done [#allocation7], 8064
    $region25: #{tpu_custom_call.1} parent=1 // pred_fallthru
      _
    // Predicated region
    $region26: #{tpu_custom_call.1} parent=1 // pred_check
      _
    $region27: #{tpu_custom_call.1} parent=1 // pred_check_branch
      %62 = sbr.rel (0) target = $region29
    $region28: #{tpu_custom_call.1} parent=1 // pred_region
      %63 = dma.done [#allocation7], 192
    $region29: #{tpu_custom_call.1} parent=1 // pred_fallthru
      _
    // Predicated region
    $region30: #{tpu_custom_call.1} parent=1 // pred_check
      _
    $region31: #{tpu_custom_call.1} parent=1 // pred_check_branch
      %65 = sbr.rel (0) target = $region33
    $region32: #{tpu_custom_call.1} parent=1 // pred_region
      %66 = dma.done [#allocation5], 64
    $region33: #{tpu_custom_call.1} parent=1 // pred_fallthru
      _
    %67 = sfence
    %v68 = vld [vmem:[#allocation2] sm:$0x1]
    %v69 = vld [vmem:[#allocation6] sm:$0xff]
    %v70 = vld [vmem:[#allocation6 + $0x8] sm:$0xff]
    %v71 = vld [vmem:[#allocation6 + $0x10] sm:$0xff]
    %v72 = vld [vmem:[#allocation6 + $0x18] sm:$0xff]
    %v73 = vld [vmem:[#allocation6 + $0x20] sm:$0xff]
    %v74 = vld [vmem:[#allocation6 + $0x28] sm:$0xff]
    %v75 = vld [vmem:[#allocation6 + $0x30] sm:$0xff]
    %v76 = vld [vmem:[#allocation6 + $0x38] sm:$0xff]
    %v77 = vld [vmem:[#allocation6 + $0x40] sm:$0xff]
    %v78 = vld [vmem:[#allocation6 + $0x48] sm:$0xff]
    %v79 = vld [vmem:[#allocation6 + $0x50] sm:$0xff]
    %v80 = vld [vmem:[#allocation6 + $0x58] sm:$0xff]
    %v81 = vld [vmem:[#allocation6 + $0x60] sm:$0xff]
    %v82 = vld [vmem:[#allocation6 + $0x68] sm:$0xff]
    %v83 = vld [vmem:[#allocation6 + $0x70] sm:$0xff]
    %v84 = vld [vmem:[#allocation6 + $0x78] sm:$0xff]
    %v85 = vld [vmem:[#allocation6 + $0x80] sm:$0xff]
    %v86 = vld [vmem:[#allocation6 + $0x88] sm:$0xff]
    %v87 = vld [vmem:[#allocation6 + $0x90] sm:$0xff]
    %v88 = vld [vmem:[#allocation6 + $0x98] sm:$0xff]
    %v89 = vld [vmem:[#allocation6 + $0xa0] sm:$0xff]
    %s90 = scalar_lea.vmem [#allocation6], 168
    %v91 = vld [vmem:[%s90] sm:$0xff]
    %v92 = vld [vmem:[%s90 + $0x8] sm:$0xff]
    %v93 = vld [vmem:[%s90 + $0x10] sm:$0xff]
    %v94 = vld [vmem:[%s90 + $0x18] sm:$0xff]
    %v95 = vld [vmem:[%s90 + $0x20] sm:$0xff]
    %v96 = vld [vmem:[%s90 + $0x28] sm:$0xff]
    %v97 = vld [vmem:[%s90 + $0x30] sm:$0xff]
    %v98 = vld [vmem:[%s90 + $0x38] sm:$0xff]
    %v99 = vld [vmem:[%s90 + $0x40] sm:$0xff]
    %v100 = vld [vmem:[%s90 + $0x48] sm:$0xff]
    %v101 = vld [vmem:[%s90 + $0x50] sm:$0xff]
    %v102 = vld [vmem:[%s90 + $0x58] sm:$0xff]
    %v103 = vld [vmem:[%s90 + $0x60] sm:$0xff]
    %v104 = vld [vmem:[%s90 + $0x68] sm:$0xff]
    %v105 = vld [vmem:[%s90 + $0x70] sm:$0xff]
    %v106 = vld [vmem:[%s90 + $0x78] sm:$0xff]
    %v107 = vld [vmem:[%s90 + $0x80] sm:$0xff]
    %v108 = vld [vmem:[%s90 + $0x88] sm:$0xff]
    %v109 = vld [vmem:[%s90 + $0x90] sm:$0xff]
    %v110 = vld [vmem:[%s90 + $0x98] sm:$0xff]
    %v111 = vld [vmem:[%s90 + $0xa0] sm:$0xff]
    %s112 = scalar_lea.vmem [#allocation6], 336
    %v113 = vld [vmem:[%s112] sm:$0xff]
    %v114 = vld [vmem:[%s112 + $0x8] sm:$0xff]
    %v115 = vld [vmem:[%s112 + $0x10] sm:$0xff]
    %v116 = vld [vmem:[%s112 + $0x18] sm:$0xff]
    %v117 = vld [vmem:[%s112 + $0x20] sm:$0xff]
    %v118 = vld [vmem:[%s112 + $0x28] sm:$0xff]
    %v119 = vld [vmem:[%s112 + $0x30] sm:$0xff]
    %v120 = vld [vmem:[%s112 + $0x38] sm:$0xff]
    %v121 = vld [vmem:[%s112 + $0x40] sm:$0xff]
    %v122 = vld [vmem:[%s112 + $0x48] sm:$0xff]
    %v123 = vld [vmem:[%s112 + $0x50] sm:$0xff]
    %v124 = vld [vmem:[%s112 + $0x58] sm:$0xff]
    %v125 = vld [vmem:[%s112 + $0x60] sm:$0xff]
    %v126 = vld [vmem:[%s112 + $0x68] sm:$0xff]
    %v127 = vld [vmem:[%s112 + $0x70] sm:$0xff]
    %v128 = vld [vmem:[%s112 + $0x78] sm:$0xff]
    %v129 = vld [vmem:[%s112 + $0x80] sm:$0xff]
    %v130 = vld [vmem:[%s112 + $0x88] sm:$0xff]
    %v131 = vld [vmem:[%s112 + $0x90] sm:$0xff]
    %v132 = vld [vmem:[%s112 + $0x98] sm:$0xff]
    %v133 = vld [vmem:[%s112 + $0xa0] sm:$0xff]
    %v134 = vld [vmem:[#allocation8] ss:$4 sm:$0x7]
    %v136 = vlaneseq
    %v137 = vshrl.u32 %v136, 7
    %v138 = vsub.s32 0, %v137
    %v139 = vrot.slane %v134, %v138
    %v140 = vlaneseq
    %v141 = vshrl.u32 %v140, 7
    %v142 = vsub.s32 1, %v141
    %v143 = vrot.slane %v134, %v142
    %v144 = vlaneseq
    %v145 = vshrl.u32 %v144, 7
    %v146 = vsub.s32 2, %v145
    %v147 = vrot.slane %v134, %v146
    %vm151 = vcmask 457728
    %v153 = vsel %vm151, %v68, 0
    %155 = vmatprep.subr.mxu0 %v70
    %156 = vmatpush1.msra.mxu0 %v69
    %157 = vmatprep.subr.mxu0 %v73
    %158 = vmatpush1.msra.mxu0 %v72
    %159 = vmatprep.subr.mxu0 %v76
    %160 = vmatpush1.msra.mxu0 %v75
    %161 = vmatprep.subr.mxu0 %v79
    %162 = vmatpush1.msra.mxu0 %v78
    %163 = vmatprep.subr.mxu0 %v82
    %164 = vmatpush1.msra.mxu0 %v81
    %165 = vmatprep.subr.mxu0 %v85
    %166 = vmatpush1.msra.mxu0 %v84
    %167 = vmatprep.subr.mxu0 %v88
    %168 = vmatpush1.msra.mxu0 %v87
    %169 = vmatprep.subr.mxu0 0.0
    %170 = vmatpush1.msra.mxu0 0.0
    %171 = vmatprep.subr.mxu0 0.0
    %172 = vmatpush1.msra.mxu0 0.0
    %173 = vmatprep.subr.mxu0 0.0
    %174 = vmatpush1.msra.mxu0 0.0
    %175 = vmatprep.subr.mxu0 0.0
    %176 = vmatpush1.msra.mxu0 0.0
    %177 = vmatprep.subr.mxu0 0.0
    %178 = vmatpush1.msra.mxu0 0.0
    %179 = vmatprep.subr.mxu0 0.0
    %180 = vmatpush1.msra.mxu0 0.0
    %181 = vmatprep.subr.mxu0 0.0
    %182 = vmatpush1.msra.mxu0 0.0
    %183 = vmatprep.subr.mxu0 0.0
    %184 = vmatpush1.msra.mxu0 0.0
    %185 = vmatprep.subr.mxu0 0.0
    %186 = vmatpush1.msra.mxu0 0.0
    %187 = vmatprep.subr.mxu0 0.0
    %188 = vmatpush1.msra.mxu0 0.0
    %189 = vmatprep.subr.mxu0 0.0
    %190 = vmatpush1.msra.mxu0 0.0
    %191 = vmatprep.subr.mxu0 0.0
    %192 = vmatpush1.msra.mxu0 0.0
    %193 = vmatprep.subr.mxu0 0.0
    %194 = vmatpush1.msra.mxu0 0.0
    %195 = vmatprep.subr.mxu0 0.0
    %196 = vmatpush1.msra.mxu0 0.0
    %197 = vmatprep.subr.mxu0 0.0
    %198 = vmatpush1.msra.mxu0 0.0
    %199 = vmatprep.subr.mxu0 0.0
    %200 = vmatpush1.msra.mxu0 0.0
    %201 = vmatprep.subr.mxu0 0.0
    %202 = vmatpush1.msra.mxu0 0.0
    %203 = vmatprep.subr.mxu0 0.0
    %204 = vmatpush1.msra.mxu0 0.0
    %205 = vmatprep.subr.mxu0 0.0
    %206 = vmatpush1.msra.mxu0 0.0
    %207 = vmatprep.subr.mxu0 0.0
    %208 = vmatpush1.msra.mxu0 0.0
    %209 = vmatprep.subr.mxu0 0.0
    %210 = vmatpush1.msra.mxu0 0.0
    %211 = vmatprep.subr.mxu0 0.0
    %212 = vmatpush1.msra.mxu0 0.0
    %213 = vmatprep.subr.mxu0 0.0
    %214 = vmatpush1.msra.mxu0 0.0
    %215 = vmatprep.subr.mxu0 0.0
    %216 = vmatpush1.msra.mxu0 0.0
    %217 = vmatprep.subr.mxu0 0.0
    %218 = vmatpush1.msra.mxu0 0.0
    %219 = vmatprep.mubr.f32.mxu0 0.0
    %220 = vmatmul.mubr.f32.gmra.mrb[0].mxu0 %v153
    %v221 = vpop.f32.mrb[0].mxu0
    %v222 = vadd.f32 %v139, %v221
    %v223 = vpop.f32.mrb[0].mxu0
    %v224 = vadd.f32 %v143, %v223
    %225 = vdwg.mxu0
    %226 = vmatprep.subr.mxu0 0.0
    %227 = vmatpush1.msra.mxu0 %v71
    %228 = vmatprep.subr.mxu0 0.0
    %229 = vmatpush1.msra.mxu0 %v74
    %230 = vmatprep.subr.mxu0 0.0
    %231 = vmatpush1.msra.mxu0 %v77
    %232 = vmatprep.subr.mxu0 0.0
    %233 = vmatpush1.msra.mxu0 %v80
    %234 = vmatprep.subr.mxu0 0.0
    %235 = vmatpush1.msra.mxu0 %v83
    %236 = vmatprep.subr.mxu0 0.0
    %237 = vmatpush1.msra.mxu0 %v86
    %238 = vmatprep.subr.mxu0 0.0
    %239 = vmatpush1.msra.mxu0 %v89
    %240 = vmatprep.subr.mxu0 0.0
    %241 = vmatpush1.msra.mxu0 0.0
    %242 = vmatprep.subr.mxu0 0.0
    %243 = vmatpush1.msra.mxu0 0.0
    %244 = vmatprep.subr.mxu0 0.0
    %245 = vmatpush1.msra.mxu0 0.0
    %246 = vmatprep.subr.mxu0 0.0
    %247 = vmatpush1.msra.mxu0 0.0
    %248 = vmatprep.subr.mxu0 0.0
    %249 = vmatpush1.msra.mxu0 0.0
    %250 = vmatprep.subr.mxu0 0.0
    %251 = vmatpush1.msra.mxu0 0.0
    %252 = vmatprep.subr.mxu0 0.0
    %253 = vmatpush1.msra.mxu0 0.0
    %254 = vmatprep.subr.mxu0 0.0
    %255 = vmatpush1.msra.mxu0 0.0
    %256 = vmatprep.subr.mxu0 0.0
    %257 = vmatpush1.msra.mxu0 0.0
    %258 = vmatprep.subr.mxu0 0.0
    %259 = vmatpush1.msra.mxu0 0.0
    %260 = vmatprep.subr.mxu0 0.0
    %261 = vmatpush1.msra.mxu0 0.0
    %262 = vmatprep.subr.mxu0 0.0
    %263 = vmatpush1.msra.mxu0 0.0
    %264 = vmatprep.subr.mxu0 0.0
    %265 = vmatpush1.msra.mxu0 0.0
    %266 = vmatprep.subr.mxu0 0.0
    %267 = vmatpush1.msra.mxu0 0.0
    %268 = vmatprep.subr.mxu0 0.0
    %269 = vmatpush1.msra.mxu0 0.0
    %270 = vmatprep.subr.mxu0 0.0
    %271 = vmatpush1.msra.mxu0 0.0
    %272 = vmatprep.subr.mxu0 0.0
    %273 = vmatpush1.msra.mxu0 0.0
    %274 = vmatprep.subr.mxu0 0.0
    %275 = vmatpush1.msra.mxu0 0.0
    %276 = vmatprep.subr.mxu0 0.0
    %277 = vmatpush1.msra.mxu0 0.0
    %278 = vmatprep.subr.mxu0 0.0
    %279 = vmatpush1.msra.mxu0 0.0
    %280 = vmatprep.subr.mxu0 0.0
    %281 = vmatpush1.msra.mxu0 0.0
    %282 = vmatprep.subr.mxu0 0.0
    %283 = vmatpush1.msra.mxu0 0.0
    %284 = vmatprep.subr.mxu0 0.0
    %285 = vmatpush1.msra.mxu0 0.0
    %286 = vmatprep.subr.mxu0 0.0
    %287 = vmatpush1.msra.mxu0 0.0
    %288 = vmatprep.subr.mxu0 0.0
    %289 = vmatpush1.msra.mxu0 0.0
    %290 = vmatprep.mubr.f32.mxu0 0.0
    %291 = vmatmul.mubr.f32.gmra.mrb[0].mxu0 %v153
    %v292 = vpop.f32.mrb[0].mxu0
    %v293 = vadd.f32 %v147, %v292
    %v294 = vpop.f32.mrb[0].mxu0
    %295 = vdwg.mxu0
    %s296 = scalar_lea.vmem [#allocation8], 1
    %v297 = vld [vmem:[%s296] ss:$4 sm:$0x7]
    %v299 = vlaneseq
    %v300 = vshrl.u32 %v299, 7
    %v301 = vsub.s32 0, %v300
    %v302 = vrot.slane %v297, %v301
    %v303 = vlaneseq
    %v304 = vshrl.u32 %v303, 7
    %v305 = vsub.s32 1, %v304
    %v306 = vrot.slane %v297, %v305
    %v307 = vlaneseq
    %v308 = vshrl.u32 %v307, 7
    %v309 = vsub.s32 2, %v308
    %v310 = vrot.slane %v297, %v309
    %314 = vmatprep.subr.mxu0 %v92
    %315 = vmatpush1.msra.mxu0 %v91
    %316 = vmatprep.subr.mxu0 %v95
    %317 = vmatpush1.msra.mxu0 %v94
    %318 = vmatprep.subr.mxu0 %v98
    %319 = vmatpush1.msra.mxu0 %v97
    %320 = vmatprep.subr.mxu0 %v101
    %321 = vmatpush1.msra.mxu0 %v100
    %322 = vmatprep.subr.mxu0 %v104
    %323 = vmatpush1.msra.mxu0 %v103
    %324 = vmatprep.subr.mxu0 %v107
    %325 = vmatpush1.msra.mxu0 %v106
    %326 = vmatprep.subr.mxu0 %v110
    %327 = vmatpush1.msra.mxu0 %v109
    %328 = vmatprep.subr.mxu0 0.0
    %329 = vmatpush1.msra.mxu0 0.0
    %330 = vmatprep.subr.mxu0 0.0
    %331 = vmatpush1.msra.mxu0 0.0
    %332 = vmatprep.subr.mxu0 0.0
    %333 = vmatpush1.msra.mxu0 0.0
    %334 = vmatprep.subr.mxu0 0.0
    %335 = vmatpush1.msra.mxu0 0.0
    %336 = vmatprep.subr.mxu0 0.0
    %337 = vmatpush1.msra.mxu0 0.0
    %338 = vmatprep.subr.mxu0 0.0
    %339 = vmatpush1.msra.mxu0 0.0
    %340 = vmatprep.subr.mxu0 0.0
    %341 = vmatpush1.msra.mxu0 0.0
    %342 = vmatprep.subr.mxu0 0.0
    %343 = vmatpush1.msra.mxu0 0.0
    %344 = vmatprep.subr.mxu0 0.0
    %345 = vmatpush1.msra.mxu0 0.0
    %346 = vmatprep.subr.mxu0 0.0
    %347 = vmatpush1.msra.mxu0 0.0
    %348 = vmatprep.subr.mxu0 0.0
    %349 = vmatpush1.msra.mxu0 0.0
    %350 = vmatprep.subr.mxu0 0.0
    %351 = vmatpush1.msra.mxu0 0.0
    %352 = vmatprep.subr.mxu0 0.0
    %353 = vmatpush1.msra.mxu0 0.0
    %354 = vmatprep.subr.mxu0 0.0
    %355 = vmatpush1.msra.mxu0 0.0
    %356 = vmatprep.subr.mxu0 0.0
    %357 = vmatpush1.msra.mxu0 0.0
    %358 = vmatprep.subr.mxu0 0.0
    %359 = vmatpush1.msra.mxu0 0.0
    %360 = vmatprep.subr.mxu0 0.0
    %361 = vmatpush1.msra.mxu0 0.0
    %362 = vmatprep.subr.mxu0 0.0
    %363 = vmatpush1.msra.mxu0 0.0
    %364 = vmatprep.subr.mxu0 0.0
    %365 = vmatpush1.msra.mxu0 0.0
    %366 = vmatprep.subr.mxu0 0.0
    %367 = vmatpush1.msra.mxu0 0.0
    %368 = vmatprep.subr.mxu0 0.0
    %369 = vmatpush1.msra.mxu0 0.0
    %370 = vmatprep.subr.mxu0 0.0
    %371 = vmatpush1.msra.mxu0 0.0
    %372 = vmatprep.subr.mxu0 0.0
    %373 = vmatpush1.msra.mxu0 0.0
    %374 = vmatprep.subr.mxu0 0.0
    %375 = vmatpush1.msra.mxu0 0.0
    %376 = vmatprep.subr.mxu0 0.0
    %377 = vmatpush1.msra.mxu0 0.0
    %378 = vmatprep.mubr.f32.mxu0 0.0
    %379 = vmatmul.mubr.f32.gmra.mrb[0].mxu0 %v153
    %v380 = vpop.f32.mrb[0].mxu0
    %v381 = vadd.f32 %v302, %v380
    %v382 = vpop.f32.mrb[0].mxu0
    %v383 = vadd.f32 %v306, %v382
    %384 = vdwg.mxu0
    %385 = vmatprep.subr.mxu0 0.0
    %386 = vmatpush1.msra.mxu0 %v93
    %387 = vmatprep.subr.mxu0 0.0
    %388 = vmatpush1.msra.mxu0 %v96
    %389 = vmatprep.subr.mxu0 0.0
    %390 = vmatpush1.msra.mxu0 %v99
    %391 = vmatprep.subr.mxu0 0.0
    %392 = vmatpush1.msra.mxu0 %v102
    %393 = vmatprep.subr.mxu0 0.0
    %394 = vmatpush1.msra.mxu0 %v105
    %395 = vmatprep.subr.mxu0 0.0
    %396 = vmatpush1.msra.mxu0 %v108
    %397 = vmatprep.subr.mxu0 0.0
    %398 = vmatpush1.msra.mxu0 %v111
    %399 = vmatprep.subr.mxu0 0.0
    %400 = vmatpush1.msra.mxu0 0.0
    %401 = vmatprep.subr.mxu0 0.0
    %402 = vmatpush1.msra.mxu0 0.0
    %403 = vmatprep.subr.mxu0 0.0
    %404 = vmatpush1.msra.mxu0 0.0
    %405 = vmatprep.subr.mxu0 0.0
    %406 = vmatpush1.msra.mxu0 0.0
    %407 = vmatprep.subr.mxu0 0.0
    %408 = vmatpush1.msra.mxu0 0.0
    %409 = vmatprep.subr.mxu0 0.0
    %410 = vmatpush1.msra.mxu0 0.0
    %411 = vmatprep.subr.mxu0 0.0
    %412 = vmatpush1.msra.mxu0 0.0
    %413 = vmatprep.subr.mxu0 0.0
    %414 = vmatpush1.msra.mxu0 0.0
    %415 = vmatprep.subr.mxu0 0.0
    %416 = vmatpush1.msra.mxu0 0.0
    %417 = vmatprep.subr.mxu0 0.0
    %418 = vmatpush1.msra.mxu0 0.0
    %419 = vmatprep.subr.mxu0 0.0
    %420 = vmatpush1.msra.mxu0 0.0
    %421 = vmatprep.subr.mxu0 0.0
    %422 = vmatpush1.msra.mxu0 0.0
    %423 = vmatprep.subr.mxu0 0.0
    %424 = vmatpush1.msra.mxu0 0.0
    %425 = vmatprep.subr.mxu0 0.0
    %426 = vmatpush1.msra.mxu0 0.0
    %427 = vmatprep.subr.mxu0 0.0
    %428 = vmatpush1.msra.mxu0 0.0
    %429 = vmatprep.subr.mxu0 0.0
    %430 = vmatpush1.msra.mxu0 0.0
    %431 = vmatprep.subr.mxu0 0.0
    %432 = vmatpush1.msra.mxu0 0.0
    %433 = vmatprep.subr.mxu0 0.0
    %434 = vmatpush1.msra.mxu0 0.0
    %435 = vmatprep.subr.mxu0 0.0
    %436 = vmatpush1.msra.mxu0 0.0
    %437 = vmatprep.subr.mxu0 0.0
    %438 = vmatpush1.msra.mxu0 0.0
    %439 = vmatprep.subr.mxu0 0.0
    %440 = vmatpush1.msra.mxu0 0.0
    %441 = vmatprep.subr.mxu0 0.0
    %442 = vmatpush1.msra.mxu0 0.0
    %443 = vmatprep.subr.mxu0 0.0
    %444 = vmatpush1.msra.mxu0 0.0
    %445 = vmatprep.subr.mxu0 0.0
    %446 = vmatpush1.msra.mxu0 0.0
    %447 = vmatprep.subr.mxu0 0.0
    %448 = vmatpush1.msra.mxu0 0.0
    %449 = vmatprep.mubr.f32.mxu0 0.0
    %450 = vmatmul.mubr.f32.gmra.mrb[0].mxu0 %v153
    %v451 = vpop.f32.mrb[0].mxu0
    %v452 = vadd.f32 %v310, %v451
    %v453 = vpop.f32.mrb[0].mxu0
    %454 = vdwg.mxu0
    %s455 = scalar_lea.vmem [#allocation8], 2
    %v456 = vld [vmem:[%s455] ss:$4 sm:$0x7]
    %v458 = vlaneseq
    %v459 = vshrl.u32 %v458, 7
    %v460 = vsub.s32 0, %v459
    %v461 = vrot.slane %v456, %v460
    %v462 = vlaneseq
    %v463 = vshrl.u32 %v462, 7
    %v464 = vsub.s32 1, %v463
    %v465 = vrot.slane %v456, %v464
    %v466 = vlaneseq
    %v467 = vshrl.u32 %v466, 7
    %v468 = vsub.s32 2, %v467
    %v469 = vrot.slane %v456, %v468
    %473 = vmatprep.subr.mxu0 %v114
    %474 = vmatpush1.msra.mxu0 %v113
    %475 = vmatprep.subr.mxu0 %v117
    %476 = vmatpush1.msra.mxu0 %v116
    %477 = vmatprep.subr.mxu0 %v120
    %478 = vmatpush1.msra.mxu0 %v119
    %479 = vmatprep.subr.mxu0 %v123
    %480 = vmatpush1.msra.mxu0 %v122
    %481 = vmatprep.subr.mxu0 %v126
    %482 = vmatpush1.msra.mxu0 %v125
    %483 = vmatprep.subr.mxu0 %v129
    %484 = vmatpush1.msra.mxu0 %v128
    %485 = vmatprep.subr.mxu0 %v132
    %486 = vmatpush1.msra.mxu0 %v131
    %487 = vmatprep.subr.mxu0 0.0
    %488 = vmatpush1.msra.mxu0 0.0
    %489 = vmatprep.subr.mxu0 0.0
    %490 = vmatpush1.msra.mxu0 0.0
    %491 = vmatprep.subr.mxu0 0.0
    %492 = vmatpush1.msra.mxu0 0.0
    %493 = vmatprep.subr.mxu0 0.0
    %494 = vmatpush1.msra.mxu0 0.0
    %495 = vmatprep.subr.mxu0 0.0
    %496 = vmatpush1.msra.mxu0 0.0
    %497 = vmatprep.subr.mxu0 0.0
    %498 = vmatpush1.msra.mxu0 0.0
    %499 = vmatprep.subr.mxu0 0.0
    %500 = vmatpush1.msra.mxu0 0.0
    %501 = vmatprep.subr.mxu0 0.0
    %502 = vmatpush1.msra.mxu0 0.0
    %503 = vmatprep.subr.mxu0 0.0
    %504 = vmatpush1.msra.mxu0 0.0
    %505 = vmatprep.subr.mxu0 0.0
    %506 = vmatpush1.msra.mxu0 0.0
    %507 = vmatprep.subr.mxu0 0.0
    %508 = vmatpush1.msra.mxu0 0.0
    %509 = vmatprep.subr.mxu0 0.0
    %510 = vmatpush1.msra.mxu0 0.0
    %511 = vmatprep.subr.mxu0 0.0
    %512 = vmatpush1.msra.mxu0 0.0
    %513 = vmatprep.subr.mxu0 0.0
    %514 = vmatpush1.msra.mxu0 0.0
    %515 = vmatprep.subr.mxu0 0.0
    %516 = vmatpush1.msra.mxu0 0.0
    %517 = vmatprep.subr.mxu0 0.0
    %518 = vmatpush1.msra.mxu0 0.0
    %519 = vmatprep.subr.mxu0 0.0
    %520 = vmatpush1.msra.mxu0 0.0
    %521 = vmatprep.subr.mxu0 0.0
    %522 = vmatpush1.msra.mxu0 0.0
    %523 = vmatprep.subr.mxu0 0.0
    %524 = vmatpush1.msra.mxu0 0.0
    %525 = vmatprep.subr.mxu0 0.0
    %526 = vmatpush1.msra.mxu0 0.0
    %527 = vmatprep.subr.mxu0 0.0
    %528 = vmatpush1.msra.mxu0 0.0
    %529 = vmatprep.subr.mxu0 0.0
    %530 = vmatpush1.msra.mxu0 0.0
    %531 = vmatprep.subr.mxu0 0.0
    %532 = vmatpush1.msra.mxu0 0.0
    %533 = vmatprep.subr.mxu0 0.0
    %534 = vmatpush1.msra.mxu0 0.0
    %535 = vmatprep.subr.mxu0 0.0
    %536 = vmatpush1.msra.mxu0 0.0
    %537 = vmatprep.mubr.f32.mxu0 0.0
    %538 = vmatmul.mubr.f32.gmra.mrb[0].mxu0 %v153
    %v539 = vpop.f32.mrb[0].mxu0
    %v540 = vadd.f32 %v461, %v539
    %v541 = vpop.f32.mrb[0].mxu0
    %v542 = vadd.f32 %v465, %v541
    %543 = vdwg.mxu0
    %544 = vmatprep.subr.mxu0 0.0
    %545 = vmatpush1.msra.mxu0 %v115
    %546 = vmatprep.subr.mxu0 0.0
    %547 = vmatpush1.msra.mxu0 %v118
    %548 = vmatprep.subr.mxu0 0.0
    %549 = vmatpush1.msra.mxu0 %v121
    %550 = vmatprep.subr.mxu0 0.0
    %551 = vmatpush1.msra.mxu0 %v124
    %552 = vmatprep.subr.mxu0 0.0
    %553 = vmatpush1.msra.mxu0 %v127
    %554 = vmatprep.subr.mxu0 0.0
    %555 = vmatpush1.msra.mxu0 %v130
    %556 = vmatprep.subr.mxu0 0.0
    %557 = vmatpush1.msra.mxu0 %v133
    %558 = vmatprep.subr.mxu0 0.0
    %559 = vmatpush1.msra.mxu0 0.0
    %560 = vmatprep.subr.mxu0 0.0
    %561 = vmatpush1.msra.mxu0 0.0
    %562 = vmatprep.subr.mxu0 0.0
    %563 = vmatpush1.msra.mxu0 0.0
    %564 = vmatprep.subr.mxu0 0.0
    %565 = vmatpush1.msra.mxu0 0.0
    %566 = vmatprep.subr.mxu0 0.0
    %567 = vmatpush1.msra.mxu0 0.0
    %568 = vmatprep.subr.mxu0 0.0
    %569 = vmatpush1.msra.mxu0 0.0
    %570 = vmatprep.subr.mxu0 0.0
    %571 = vmatpush1.msra.mxu0 0.0
    %572 = vmatprep.subr.mxu0 0.0
    %573 = vmatpush1.msra.mxu0 0.0
    %574 = vmatprep.subr.mxu0 0.0
    %575 = vmatpush1.msra.mxu0 0.0
    %576 = vmatprep.subr.mxu0 0.0
    %577 = vmatpush1.msra.mxu0 0.0
    %578 = vmatprep.subr.mxu0 0.0
    %579 = vmatpush1.msra.mxu0 0.0
    %580 = vmatprep.subr.mxu0 0.0
    %581 = vmatpush1.msra.mxu0 0.0
    %582 = vmatprep.subr.mxu0 0.0
    %583 = vmatpush1.msra.mxu0 0.0
    %584 = vmatprep.subr.mxu0 0.0
    %585 = vmatpush1.msra.mxu0 0.0
    %586 = vmatprep.subr.mxu0 0.0
    %587 = vmatpush1.msra.mxu0 0.0
    %588 = vmatprep.subr.mxu0 0.0
    %589 = vmatpush1.msra.mxu0 0.0
    %590 = vmatprep.subr.mxu0 0.0
    %591 = vmatpush1.msra.mxu0 0.0
    %592 = vmatprep.subr.mxu0 0.0
    %593 = vmatpush1.msra.mxu0 0.0
    %594 = vmatprep.subr.mxu0 0.0
    %595 = vmatpush1.msra.mxu0 0.0
    %596 = vmatprep.subr.mxu0 0.0
    %597 = vmatpush1.msra.mxu0 0.0
    %598 = vmatprep.subr.mxu0 0.0
    %599 = vmatpush1.msra.mxu0 0.0
    %600 = vmatprep.subr.mxu0 0.0
    %601 = vmatpush1.msra.mxu0 0.0
    %602 = vmatprep.subr.mxu0 0.0
    %603 = vmatpush1.msra.mxu0 0.0
    %604 = vmatprep.subr.mxu0 0.0
    %605 = vmatpush1.msra.mxu0 0.0
    %606 = vmatprep.subr.mxu0 0.0
    %607 = vmatpush1.msra.mxu0 0.0
    %608 = vmatprep.mubr.f32.mxu0 0.0
    %609 = vmatmul.mubr.f32.gmra.mrb[0].mxu0 %v153
    %v610 = vpop.f32.mrb[0].mxu0
    %v611 = vadd.f32 %v469, %v610
    %v612 = vpop.f32.mrb[0].mxu0
    %613 = vdwg.mxu0
    %s614 = sld [smem:[#allocation9]]
    %v615 = vstv %s614
    %v616 = vmul.f32 %v615, %v222
    %v617 = vmul.f32 %v615, %v224
    %v618 = vmul.f32 %v615, %v293
    %s619 = sld [smem:[#allocation9 + $0x1]]
    %v620 = vstv %s619
    %v621 = vmul.f32 %v620, %v381
    %v622 = vmul.f32 %v620, %v383
    %v623 = vmul.f32 %v620, %v452
    %v624 = vadd.f32 %v616, %v621
    %v625 = vadd.f32 %v617, %v622
    %v626 = vadd.f32 %v618, %v623
    %s627 = sld [smem:[#allocation9 + $0x2]]
    %v628 = vstv %s627
    %v629 = vmul.f32 %v628, %v540
    %v630 = vmul.f32 %v628, %v542
    %v631 = vmul.f32 %v628, %v611
    %v632 = vadd.f32 %v624, %v629
    %v633 = vadd.f32 %v625, %v630
    %v634 = vadd.f32 %v626, %v631
    %s635 = sld [smem:[#allocation9 + $0x3]]
    %v636 = vstv %s635
    %v637 = vadd.f32 %v632, %v636
    %v638 = vadd.f32 %v633, %v636
    %v639 = vadd.f32 %v634, %v636
    %v643 = vcombine.low %v637, %v638
    %v645 = vunpack.c.l.s4 1966171168
    %v646 = vunpack.c.0.s8 %v645
    %v647 = vlaneseq
    %v648 = vshrl.u32 %v647, 7
    %v649 = vsub.s32 %v646, %v648
    %v650 = vrot.slane %v643, %v649
    %v652 = vunpack.c.l.s4 1966171168
    %v653 = vunpack.c.0.s8 %v652
    %v654 = vlaneseq
    %v655 = vshrl.u32 %v654, 7
    %v656 = vsub.s32 %v653, %v655
    %v657 = vrot.slane %v639, %v656
    %v658 = vcombine.low %v650, %v657
    %v660 = vunpack.c.l.s4 1966171168
    %v661 = vunpack.c.0.s8 %v660
    %v662 = vlaneseq
    %v663 = vshrl.u32 %v662, 7
    %v664 = vsub.s32 %v661, %v663
    %v665 = vrot.slane %v658, %v664
    %v667 = vlaneseq
    %vm668 = vcmp.ge.s32.totalorder %v667, 0
    %vm669 = vcmp.lt.s32.totalorder %v667, 384
    %vm670 = vmand %vm668, %vm669
    %671 = vst.msk [vmem:[#allocation10] ss:$4 sm:$0x7] %vm670, %v665
    %s672 = sld [smem:[#allocation9 + $0x80]]
    %v673 = vstv %s672
    %v674 = vmul.f32 %v673, %v222
    %v675 = vmul.f32 %v673, %v224
    %v676 = vmul.f32 %v673, %v293
    %s677 = sld [smem:[#allocation9 + $0x81]]
    %v678 = vstv %s677
    %v679 = vmul.f32 %v678, %v381
    %v680 = vmul.f32 %v678, %v383
    %v681 = vmul.f32 %v678, %v452
    %v682 = vadd.f32 %v674, %v679
    %v683 = vadd.f32 %v675, %v680
    %v684 = vadd.f32 %v676, %v681
    %s685 = sld [smem:[#allocation9 + $0x82]]
    %v686 = vstv %s685
    %v687 = vmul.f32 %v686, %v540
    %v688 = vmul.f32 %v686, %v542
    %v689 = vmul.f32 %v686, %v611
    %v690 = vadd.f32 %v682, %v687
    %v691 = vadd.f32 %v683, %v688
    %v692 = vadd.f32 %v684, %v689
    %s693 = sld [smem:[#allocation9 + $0x83]]
    %v694 = vstv %s693
    %v695 = vadd.f32 %v690, %v694
    %v696 = vadd.f32 %v691, %v694
    %v697 = vadd.f32 %v692, %v694
    %v701 = vcombine.low %v695, %v696
    %v703 = vunpack.c.l.s4 1966171168
    %v704 = vunpack.c.0.s8 %v703
    %v705 = vlaneseq
    %v706 = vshrl.u32 %v705, 7
    %v707 = vsub.s32 %v704, %v706
    %v708 = vrot.slane %v701, %v707
    %v710 = vunpack.c.l.s4 1966171168
    %v711 = vunpack.c.0.s8 %v710
    %v712 = vlaneseq
    %v713 = vshrl.u32 %v712, 7
    %v714 = vsub.s32 %v711, %v713
    %v715 = vrot.slane %v697, %v714
    %v716 = vcombine.low %v708, %v715
    %v718 = vunpack.c.l.s4 1966171168
    %v719 = vunpack.c.0.s8 %v718
    %v720 = vlaneseq
    %v721 = vshrl.u32 %v720, 7
    %v722 = vsub.s32 %v719, %v721
    %v723 = vrot.slane %v716, %v722
    %s725 = scalar_lea.vmem [#allocation10], 1
    %726 = vst.msk [vmem:[%s725] ss:$4 sm:$0x7] %vm670, %v723
    %s727 = sld [smem:[#allocation9 + $0x100]]
    %v728 = vstv %s727
    %v729 = vmul.f32 %v728, %v222
    %v730 = vmul.f32 %v728, %v224
    %v731 = vmul.f32 %v728, %v293
    %s732 = sld [smem:[#allocation9 + $0x101]]
    %v733 = vstv %s732
    %v734 = vmul.f32 %v733, %v381
    %v735 = vmul.f32 %v733, %v383
    %v736 = vmul.f32 %v733, %v452
    %v737 = vadd.f32 %v729, %v734
    %v738 = vadd.f32 %v730, %v735
    %v739 = vadd.f32 %v731, %v736
    %s740 = sld [smem:[#allocation9 + $0x102]]
    %v741 = vstv %s740
    %v742 = vmul.f32 %v741, %v540
    %v743 = vmul.f32 %v741, %v542
    %v744 = vmul.f32 %v741, %v611
    %v745 = vadd.f32 %v737, %v742
    %v746 = vadd.f32 %v738, %v743
    %v747 = vadd.f32 %v739, %v744
    %s748 = sld [smem:[#allocation9 + $0x103]]
    %v749 = vstv %s748
    %v750 = vadd.f32 %v745, %v749
    %v751 = vadd.f32 %v746, %v749
    %v752 = vadd.f32 %v747, %v749
    %v756 = vcombine.low %v750, %v751
    %v758 = vunpack.c.l.s4 1966171168
    %v759 = vunpack.c.0.s8 %v758
    %v760 = vlaneseq
    %v761 = vshrl.u32 %v760, 7
    %v762 = vsub.s32 %v759, %v761
    %v763 = vrot.slane %v756, %v762
    %v765 = vunpack.c.l.s4 1966171168
    %v766 = vunpack.c.0.s8 %v765
    %v767 = vlaneseq
    %v768 = vshrl.u32 %v767, 7
    %v769 = vsub.s32 %v766, %v768
    %v770 = vrot.slane %v752, %v769
    %v771 = vcombine.low %v763, %v770
    %v773 = vunpack.c.l.s4 1966171168
    %v774 = vunpack.c.0.s8 %v773
    %v775 = vlaneseq
    %v776 = vshrl.u32 %v775, 7
    %v777 = vsub.s32 %v774, %v776
    %v778 = vrot.slane %v771, %v777
    %s780 = scalar_lea.vmem [#allocation10], 2
    %781 = vst.msk [vmem:[%s780] ss:$4 sm:$0x7] %vm670, %v778
    // Predicated region
    $region34: #{tpu_custom_call.1} parent=1 // pred_check
      _
    $region35: #{tpu_custom_call.1} parent=1 // pred_check_branch
      %783 = sbr.rel (0) target = $region37
    $region36: #{tpu_custom_call.1} parent=1 // pred_region
      %s785 = ssub.s32 192, 192
      %786 = vsyncadd [#allocation4], %s785
      %s788 = sshll.u32 [#allocation10], 4
      %s789 = int_to_ptr.vmem [resolvable:$true] %s788
      %791 = dma.vmem_to_hbm [thread:$0]  %s789, 192, %s4, [#allocation4]
    $region37: #{tpu_custom_call.1} parent=1 // pred_fallthru
      _
    // Predicated region
    $region38: #{tpu_custom_call.1} parent=1 // pred_check
      _
    $region39: #{tpu_custom_call.1} parent=1 // pred_check_branch
      %793 = sbr.rel (0) target = $region41
    $region40: #{tpu_custom_call.1} parent=1 // pred_region
      %794 = dma.done [#allocation4], 192
    $region41: #{tpu_custom_call.1} parent=1 // pred_fallthru
      _
    %795 = vsyncpa [#allocation3], 1
    %796 = vsyncpa [#allocation7], 1
    %797 = vsyncpa [#allocation4], 1
    %798 = vsyncpa [#allocation5], 1

</llo_original>
